<compile_context>
chip_gen: v5e
topology: v5e:2x2
jax: 0.10.0
libtpu: 0.0.40
codegen_flags: <defaults>
</compile_context>

<pallas_src>
import functools

import jax
import jax.numpy as jnp
from jax.experimental import pallas as pl
from jax.experimental.pallas import tpu as pltpu


_NEG = -1.0e30  # finite "minus infinity" used to pad classes / rows


def _ce_packed_kernel(x_ref, t_ref, osum_ref, acc_ref, *, k, c_pack,
                      ignore_index):
    """Partial sum of per-token NLL over one row tile.

    x_ref : (tm, k*c_pack) logits; k original rows packed per kernel row,
            padded classes / padded rows filled with _NEG.
    t_ref : (tm, k) int32 targets (ignore_index for ignored / padded rows).
    osum_ref : (1, 128) f32; epilogue writes the total NLL sum (broadcast).
    acc_ref  : (tm, 1) f32 running per-kernel-row accumulator (VMEM scratch).
    """
    i = pl.program_id(0)

    @pl.when(i == 0)
    def _init():
        acc_ref[...] = jnp.zeros_like(acc_ref)

    x = x_ref[...].astype(jnp.float32)                       # (tm, W)
    t = t_ref[...]                                           # (tm, k) int32
    tm, w = x.shape

    lane = jax.lax.broadcasted_iota(jnp.int32, (1, w), 1)    # lane index 0..W-1

    # Static segment masks (k is a small compile-time constant, loop unrolls).
    in_segs = [(lane >= s * c_pack) & (lane < (s + 1) * c_pack)
               for s in range(k)]

    # Per-segment max (exact, matches the unpacked kernel) and lane-expanded
    # shift / target-lane index built with cheap VPU selects.
    shift = jnp.zeros_like(x)
    tgt_lane = jnp.full((tm, w), -1, jnp.int32)
    seg_max = []
    for s in range(k):
        m_s = jnp.max(jnp.where(in_segs[s], x, _NEG), axis=-1,
                      keepdims=True)                          # (tm, 1)
        seg_max.append(m_s)
        shift = jnp.where(in_segs[s], m_s, shift)
        tgt_lane = jnp.where(in_segs[s], t[:, s:s + 1] + s * c_pack, tgt_lane)

    # Single dense exp over all 128 lanes (padded class lanes underflow to 0).
    e = jnp.exp(x - shift)

    # Per-segment sum-of-exp; fold the k logs into one log via a product
    # (se_s in [1, c_pack], so the product stays far inside f32 range).
    prod = jnp.ones((tm, 1), jnp.float32)
    msum = jnp.zeros((tm, 1), jnp.float32)
    for s in range(k):
        se_s = jnp.sum(jnp.where(in_segs[s], e, 0.0), axis=-1,
                       keepdims=True)                         # (tm, 1)
        valid_s = t[:, s:s + 1] != ignore_index
        prod = prod * jnp.where(valid_s, se_s, 1.0)
        msum = msum + jnp.where(valid_s, seg_max[s], 0.0)
    lse_sum = jnp.log(prod) + msum                            # (tm, 1)

    # Target logit: ignore_index / padded rows never match, so this one
    # full-width masked sum already excludes them.
    picked = jnp.sum(jnp.where(lane == tgt_lane, x, 0.0), axis=-1,
                     keepdims=True)                           # (tm, 1)

    # Pure VPU vector accumulation; single cross-lane reduce in the epilogue.
    acc_ref[...] += lse_sum - picked

    @pl.when(i == pl.num_programs(0) - 1)
    def _fin():
        osum_ref[...] = jnp.broadcast_to(
            jnp.sum(acc_ref[...], keepdims=True), osum_ref.shape)


def _packing(ner_cnt):
    """Pick (c_pack, k): pad classes to c_pack, pack k rows per 128 lanes."""
    if ner_cnt <= 64:
        c_pack = 8
        while c_pack < ner_cnt:
            c_pack *= 2
        return c_pack, 128 // c_pack
    return ner_cnt, 1


def _choose_block_rows(r_packed, width, itemsize):
    """Packed-row tile from a VMEM budget incl. in-kernel temporaries."""
    w_pad = ((width + 127) // 128) * 128
    per_row = (2 * w_pad * itemsize      # double-buffered logits block
               + 2 * 128 * 4             # double-buffered (tm, k) i32 targets
               + 128 * 4                 # (tm, 1) f32 accumulator scratch
               + 8 * w_pad * 4)          # live (tm, W) f32/i32 temporaries
    budget = 12 * 1024 * 1024
    tm = max(8, (min(budget // per_row, 2048) // 8) * 8)
    r_pad8 = ((r_packed + 7) // 8) * 8
    return min(tm, r_pad8)


@functools.partial(jax.jit, static_argnames=("ignore_index",))
def bert_ner_loss(ner_result, ner_target, *, ignore_index=-100):
    """Mean cross-entropy matching torch.nn.functional.cross_entropy.

    ner_result: (bsz, seq_l, ner_cnt) float32 or bfloat16
    ner_target: (bsz, seq_l) int; entries equal to ignore_index are excluded
    returns: scalar float32 loss (NaN if every target is ignored, like torch)
    """
    bsz, seq_l, ner_cnt = ner_result.shape
    n = bsz * seq_l

    c_pack, k = _packing(ner_cnt)
    width = k * c_pack

    logits = ner_result.reshape(n, ner_cnt)
    targets = ner_target.reshape(n).astype(jnp.int32)

    r0 = pl.cdiv(n, k)
    tm = _choose_block_rows(r0, width, logits.dtype.itemsize)
    num_blocks = pl.cdiv(r0, tm)
    r = num_blocks * tm
    pad_rows = r * k - n
    pad_cols = c_pack - ner_cnt

    x = logits
    if pad_rows or pad_cols:
        x = jnp.pad(x, ((0, pad_rows), (0, pad_cols)), constant_values=_NEG)
    x = x.reshape(r, width)              # free row-major lane-packing reshape

    t = targets
    if pad_rows:
        t = jnp.pad(t, (0, pad_rows), constant_values=ignore_index)
    t = t.reshape(r, k)

    kernel = functools.partial(_ce_packed_kernel, k=k, c_pack=c_pack,
                               ignore_index=ignore_index)

    osum = pl.pallas_call(
        kernel,
        out_shape=jax.ShapeDtypeStruct((1, 128), jnp.float32),
        grid_spec=pltpu.PrefetchScalarGridSpec(
            num_scalar_prefetch=0,
            grid=(num_blocks,),
            in_specs=[
                pl.BlockSpec((tm, width), lambda i: (i, 0)),
                pl.BlockSpec((tm, k), lambda i: (i, 0)),
            ],
            out_specs=pl.BlockSpec((1, 128), lambda i: (0, 0)),
            scratch_shapes=[pltpu.VMEM((tm, 1), jnp.float32)],
        ),
        compiler_params=pltpu.CompilerParams(
            dimension_semantics=("arbitrary",),
            vmem_limit_bytes=32 * 1024 * 1024,
        ),
    )(x, t)

    # Divisor computed on the raw targets in the wrapper (tiny, fused by XLA).
    valid_cnt = jnp.sum((targets != ignore_index).astype(jnp.float32))
    return osum[0, 0] / valid_cnt


if __name__ == "__main__":
    key = jax.random.PRNGKey(0)
    k1, k2, k3, k4 = jax.random.split(key, 4)

    # Test 1: ner_cnt=32 -> 4 rows packed per 128-lane register row.
    bsz, seq_l, ner_cnt = 2, 8, 32
    ner_result = jax.random.normal(k1, (bsz, seq_l, ner_cnt), dtype=jnp.float32)
    ner_target = jax.random.randint(k2, (bsz, seq_l), 0, ner_cnt,
                                    dtype=jnp.int32)
    loss = jax.block_until_ready(bert_ner_loss(ner_result, ner_target))

    logp = jax.nn.log_softmax(ner_result.reshape(-1, ner_cnt), axis=-1)
    ref = -jnp.mean(jnp.take_along_axis(logp, ner_target.reshape(-1, 1),
                                        axis=-1))
    assert jnp.allclose(loss, ref, atol=1e-5, rtol=1e-5), (loss, ref)

    # Test 2: torch's default ignore_index=-100 handling.
    tgt_ign = ner_target.at[0, 0].set(-100).at[1, 3].set(-100)
    loss_ign = jax.block_until_ready(bert_ner_loss(ner_result, tgt_ign))
    flat_t = tgt_ign.reshape(-1)
    keep = flat_t != -100
    picked = jnp.take_along_axis(
        logp, jnp.clip(flat_t, 0, ner_cnt - 1)[:, None], axis=-1)[:, 0]
    ref_ign = -(jnp.sum(jnp.where(keep, picked, 0.0)) / jnp.sum(keep))
    assert jnp.allclose(loss_ign, ref_ign, atol=1e-5, rtol=1e-5), (loss_ign,
                                                                   ref_ign)

    # Test 3: non-power-of-two class count (exercises class/row padding).
    bsz3, seq3, cnt3 = 2, 7, 10
    res3 = jax.random.normal(k3, (bsz3, seq3, cnt3), dtype=jnp.float32)
    tgt3 = jax.random.randint(k4, (bsz3, seq3), 0, cnt3, dtype=jnp.int32)
    loss3 = jax.block_until_ready(bert_ner_loss(res3, tgt3))
    logp3 = jax.nn.log_softmax(res3.reshape(-1, cnt3), axis=-1)
    ref3 = -jnp.mean(jnp.take_along_axis(logp3, tgt3.reshape(-1, 1), axis=-1))
    assert jnp.allclose(loss3, ref3, atol=1e-5, rtol=1e-5), (loss3, ref3)

    print("KERNEL_OK")
</pallas_src>

<mosaic_0001>
module attributes {stable_mosaic.version = 11 : i64} {
  func.func @_ce_packed_kernel(%arg0: i32, %arg1: memref<8x128xf32, #tpu.memory_space<vmem>>, %arg2: memref<8x4xi32, #tpu.memory_space<vmem>>, %arg3: memref<1x128xf32, #tpu.memory_space<vmem>>, %arg4: memref<8x1xf32, #tpu.memory_space<vmem>>) attributes {dimension_semantics = [#tpu.dimension_semantics<arbitrary>], iteration_bounds = array<i64: 1>, scalar_prefetch = 0 : i64, scratch_operands = 1 : i64, tpu.core_type = #tpu.core_type<tc>, window_params = [{transform_indices = @transform_0, window_bounds = array<i64: 8, 128>}, {transform_indices = @transform_1, window_bounds = array<i64: 8, 4>}, {pipeline_mode = #tpu.pipeline_mode<synchronous>, transform_indices = @transform_2, window_bounds = array<i64: 1, 128>}]} {
    %c0_i32 = arith.constant 0 : i32
    %0 = arith.cmpi eq, %arg0, %c0_i32 : i32
    %1 = arith.extui %0 : i1 to i32
    %c0_i32_0 = arith.constant 0 : i32
    %2 = arith.cmpi ne, %1, %c0_i32_0 : i32
    scf.if %2 {
      %cst_49 = arith.constant 0.000000e+00 : f32
      %183 = vector.broadcast %cst_49 : f32 to vector<8x1xf32>
      %c0_50 = arith.constant 0 : index
      %c0_51 = arith.constant 0 : index
      %184 = vector.load %arg4[%c0_50, %c0_51] : memref<8x1xf32, #tpu.memory_space<vmem>>, vector<8x1xf32>
      tpu.vector_store %arg4[%c0_50, %c0_51], %183 {strides = array<i32>} : memref<8x1xf32, #tpu.memory_space<vmem>>, vector<8x1xf32>,
    } else {
    }
    %c0 = arith.constant 0 : index
    %c0_1 = arith.constant 0 : index
    %3 = vector.load %arg1[%c0, %c0_1] : memref<8x128xf32, #tpu.memory_space<vmem>>, vector<8x128xf32>
    %c0_2 = arith.constant 0 : index
    %c0_3 = arith.constant 0 : index
    %4 = vector.load %arg2[%c0_2, %c0_3] : memref<8x4xi32, #tpu.memory_space<vmem>>, vector<8x4xi32>
    %5 = tpu.iota {dimensions = array<i32: 1>} : vector<1x128xi32>
    %c0_i32_4 = arith.constant 0 : i32
    %6 = vector.broadcast %c0_i32_4 : i32 to vector<1x128xi32>
    %7 = arith.cmpi sge, %5, %6 : vector<1x128xi32>
    %c32_i32 = arith.constant 32 : i32
    %8 = vector.broadcast %c32_i32 : i32 to vector<1x128xi32>
    %9 = arith.cmpi slt, %5, %8 : vector<1x128xi32>
    %10 = arith.andi %7, %9 : vector<1x128xi1>
    %c32_i32_5 = arith.constant 32 : i32
    %11 = vector.broadcast %c32_i32_5 : i32 to vector<1x128xi32>
    %12 = arith.cmpi sge, %5, %11 : vector<1x128xi32>
    %c64_i32 = arith.constant 64 : i32
    %13 = vector.broadcast %c64_i32 : i32 to vector<1x128xi32>
    %14 = arith.cmpi slt, %5, %13 : vector<1x128xi32>
    %15 = arith.andi %12, %14 : vector<1x128xi1>
    %c64_i32_6 = arith.constant 64 : i32
    %16 = vector.broadcast %c64_i32_6 : i32 to vector<1x128xi32>
    %17 = arith.cmpi sge, %5, %16 : vector<1x128xi32>
    %c96_i32 = arith.constant 96 : i32
    %18 = vector.broadcast %c96_i32 : i32 to vector<1x128xi32>
    %19 = arith.cmpi slt, %5, %18 : vector<1x128xi32>
    %20 = arith.andi %17, %19 : vector<1x128xi1>
    %c96_i32_7 = arith.constant 96 : i32
    %21 = vector.broadcast %c96_i32_7 : i32 to vector<1x128xi32>
    %22 = arith.cmpi sge, %5, %21 : vector<1x128xi32>
    %c128_i32 = arith.constant 128 : i32
    %23 = vector.broadcast %c128_i32 : i32 to vector<1x128xi32>
    %24 = arith.cmpi slt, %5, %23 : vector<1x128xi32>
    %25 = arith.andi %22, %24 : vector<1x128xi1>
    %cst = arith.constant 0.000000e+00 : f32
    %26 = vector.broadcast %cst : f32 to vector<8x128xf32>
    %c-1_i32 = arith.constant -1 : i32
    %27 = vector.broadcast %c-1_i32 : i32 to vector<8x128xi32>
    %cst_8 = arith.constant -1.000000e+30 : f32
    %28 = vector.shape_cast %10 : vector<1x128xi1> to vector<1x128xi1>
    %29 = vector.broadcast %28 : vector<1x128xi1> to vector<8x128xi1>
    %30 = vector.broadcast %cst_8 : f32 to vector<8x128xf32>
    %31 = arith.select %29, %3, %30 : vector<8x128xi1>, vector<8x128xf32>
    %cst_9 = arith.constant dense<0xFF800000> : vector<8xf32>
    %32 = vector.multi_reduction <maximumf>, %31, %cst_9 [1] : vector<8x128xf32> to vector<8xf32>
    %33 = vector.shape_cast %32 : vector<8xf32> to vector<8x1xf32>
    %34 = vector.shape_cast %10 : vector<1x128xi1> to vector<1x128xi1>
    %35 = vector.broadcast %34 : vector<1x128xi1> to vector<8x128xi1>
    %36 = vector.shape_cast %33 : vector<8x1xf32> to vector<8x1xf32>
    %37 = vector.broadcast %36 : vector<8x1xf32> to vector<8x128xf32>
    %38 = arith.select %35, %37, %26 : vector<8x128xi1>, vector<8x128xf32>
    %39 = vector.extract_strided_slice %4 {offsets = [0, 0], sizes = [8, 1], strides = [1, 1]} : vector<8x4xi32> to vector<8x1xi32>
    %c0_i32_10 = arith.constant 0 : i32
    %40 = vector.broadcast %c0_i32_10 : i32 to vector<8x1xi32>
    %41 = arith.addi %39, %40 : vector<8x1xi32>
    %42 = vector.shape_cast %10 : vector<1x128xi1> to vector<1x128xi1>
    %43 = vector.broadcast %42 : vector<1x128xi1> to vector<8x128xi1>
    %44 = vector.shape_cast %41 : vector<8x1xi32> to vector<8x1xi32>
    %45 = vector.broadcast %44 : vector<8x1xi32> to vector<8x128xi32>
    %46 = arith.select %43, %45, %27 : vector<8x128xi1>, vector<8x128xi32>
    %cst_11 = arith.constant -1.000000e+30 : f32
    %47 = vector.shape_cast %15 : vector<1x128xi1> to vector<1x128xi1>
    %48 = vector.broadcast %47 : vector<1x128xi1> to vector<8x128xi1>
    %49 = vector.broadcast %cst_11 : f32 to vector<8x128xf32>
    %50 = arith.select %48, %3, %49 : vector<8x128xi1>, vector<8x128xf32>
    %cst_12 = arith.constant dense<0xFF800000> : vector<8xf32>
    %51 = vector.multi_reduction <maximumf>, %50, %cst_12 [1] : vector<8x128xf32> to vector<8xf32>
    %52 = vector.shape_cast %51 : vector<8xf32> to vector<8x1xf32>
    %53 = vector.shape_cast %15 : vector<1x128xi1> to vector<1x128xi1>
    %54 = vector.broadcast %53 : vector<1x128xi1> to vector<8x128xi1>
    %55 = vector.shape_cast %52 : vector<8x1xf32> to vector<8x1xf32>
    %56 = vector.broadcast %55 : vector<8x1xf32> to vector<8x128xf32>
    %57 = arith.select %54, %56, %38 : vector<8x128xi1>, vector<8x128xf32>
    %58 = vector.extract_strided_slice %4 {offsets = [0, 1], sizes = [8, 1], strides = [1, 1]} : vector<8x4xi32> to vector<8x1xi32>
    %c32_i32_13 = arith.constant 32 : i32
    %59 = vector.broadcast %c32_i32_13 : i32 to vector<8x1xi32>
    %60 = arith.addi %58, %59 : vector<8x1xi32>
    %61 = vector.shape_cast %15 : vector<1x128xi1> to vector<1x128xi1>
    %62 = vector.broadcast %61 : vector<1x128xi1> to vector<8x128xi1>
    %63 = vector.shape_cast %60 : vector<8x1xi32> to vector<8x1xi32>
    %64 = vector.broadcast %63 : vector<8x1xi32> to vector<8x128xi32>
    %65 = arith.select %62, %64, %46 : vector<8x128xi1>, vector<8x128xi32>
    %cst_14 = arith.constant -1.000000e+30 : f32
    %66 = vector.shape_cast %20 : vector<1x128xi1> to vector<1x128xi1>
    %67 = vector.broadcast %66 : vector<1x128xi1> to vector<8x128xi1>
    %68 = vector.broadcast %cst_14 : f32 to vector<8x128xf32>
    %69 = arith.select %67, %3, %68 : vector<8x128xi1>, vector<8x128xf32>
    %cst_15 = arith.constant dense<0xFF800000> : vector<8xf32>
    %70 = vector.multi_reduction <maximumf>, %69, %cst_15 [1] : vector<8x128xf32> to vector<8xf32>
    %71 = vector.shape_cast %70 : vector<8xf32> to vector<8x1xf32>
    %72 = vector.shape_cast %20 : vector<1x128xi1> to vector<1x128xi1>
    %73 = vector.broadcast %72 : vector<1x128xi1> to vector<8x128xi1>
    %74 = vector.shape_cast %71 : vector<8x1xf32> to vector<8x1xf32>
    %75 = vector.broadcast %74 : vector<8x1xf32> to vector<8x128xf32>
    %76 = arith.select %73, %75, %57 : vector<8x128xi1>, vector<8x128xf32>
    %77 = vector.extract_strided_slice %4 {offsets = [0, 2], sizes = [8, 1], strides = [1, 1]} : vector<8x4xi32> to vector<8x1xi32>
    %c64_i32_16 = arith.constant 64 : i32
    %78 = vector.broadcast %c64_i32_16 : i32 to vector<8x1xi32>
    %79 = arith.addi %77, %78 : vector<8x1xi32>
    %80 = vector.shape_cast %20 : vector<1x128xi1> to vector<1x128xi1>
    %81 = vector.broadcast %80 : vector<1x128xi1> to vector<8x128xi1>
    %82 = vector.shape_cast %79 : vector<8x1xi32> to vector<8x1xi32>
    %83 = vector.broadcast %82 : vector<8x1xi32> to vector<8x128xi32>
    %84 = arith.select %81, %83, %65 : vector<8x128xi1>, vector<8x128xi32>
    %cst_17 = arith.constant -1.000000e+30 : f32
    %85 = vector.shape_cast %25 : vector<1x128xi1> to vector<1x128xi1>
    %86 = vector.broadcast %85 : vector<1x128xi1> to vector<8x128xi1>
    %87 = vector.broadcast %cst_17 : f32 to vector<8x128xf32>
    %88 = arith.select %86, %3, %87 : vector<8x128xi1>, vector<8x128xf32>
    %cst_18 = arith.constant dense<0xFF800000> : vector<8xf32>
    %89 = vector.multi_reduction <maximumf>, %88, %cst_18 [1] : vector<8x128xf32> to vector<8xf32>
    %90 = vector.shape_cast %89 : vector<8xf32> to vector<8x1xf32>
    %91 = vector.shape_cast %25 : vector<1x128xi1> to vector<1x128xi1>
    %92 = vector.broadcast %91 : vector<1x128xi1> to vector<8x128xi1>
    %93 = vector.shape_cast %90 : vector<8x1xf32> to vector<8x1xf32>
    %94 = vector.broadcast %93 : vector<8x1xf32> to vector<8x128xf32>
    %95 = arith.select %92, %94, %76 : vector<8x128xi1>, vector<8x128xf32>
    %96 = vector.extract_strided_slice %4 {offsets = [0, 3], sizes = [8, 1], strides = [1, 1]} : vector<8x4xi32> to vector<8x1xi32>
    %c96_i32_19 = arith.constant 96 : i32
    %97 = vector.broadcast %c96_i32_19 : i32 to vector<8x1xi32>
    %98 = arith.addi %96, %97 : vector<8x1xi32>
    %99 = vector.shape_cast %25 : vector<1x128xi1> to vector<1x128xi1>
    %100 = vector.broadcast %99 : vector<1x128xi1> to vector<8x128xi1>
    %101 = vector.shape_cast %98 : vector<8x1xi32> to vector<8x1xi32>
    %102 = vector.broadcast %101 : vector<8x1xi32> to vector<8x128xi32>
    %103 = arith.select %100, %102, %84 : vector<8x128xi1>, vector<8x128xi32>
    %104 = arith.subf %3, %95 : vector<8x128xf32>
    %105 = math.exp %104 : vector<8x128xf32>
    %cst_20 = arith.constant 1.000000e+00 : f32
    %106 = vector.broadcast %cst_20 : f32 to vector<8x1xf32>
    %cst_21 = arith.constant 0.000000e+00 : f32
    %107 = vector.broadcast %cst_21 : f32 to vector<8x1xf32>
    %cst_22 = arith.constant 0.000000e+00 : f32
    %108 = vector.shape_cast %10 : vector<1x128xi1> to vector<1x128xi1>
    %109 = vector.broadcast %108 : vector<1x128xi1> to vector<8x128xi1>
    %110 = vector.broadcast %cst_22 : f32 to vector<8x128xf32>
    %111 = arith.select %109, %105, %110 : vector<8x128xi1>, vector<8x128xf32>
    %cst_23 = arith.constant dense<0.000000e+00> : vector<8xf32>
    %112 = vector.multi_reduction <add>, %111, %cst_23 [1] : vector<8x128xf32> to vector<8xf32>
    %113 = vector.shape_cast %112 : vector<8xf32> to vector<8x1xf32>
    %114 = vector.extract_strided_slice %4 {offsets = [0, 0], sizes = [8, 1], strides = [1, 1]} : vector<8x4xi32> to vector<8x1xi32>
    %c-100_i32 = arith.constant -100 : i32
    %115 = vector.broadcast %c-100_i32 : i32 to vector<8x1xi32>
    %116 = arith.cmpi ne, %114, %115 : vector<8x1xi32>
    %cst_24 = arith.constant 1.000000e+00 : f32
    %117 = vector.broadcast %cst_24 : f32 to vector<8x1xf32>
    %118 = arith.select %116, %113, %117 : vector<8x1xi1>, vector<8x1xf32>
    %119 = arith.mulf %106, %118 : vector<8x1xf32>
    %cst_25 = arith.constant 0.000000e+00 : f32
    %120 = vector.broadcast %cst_25 : f32 to vector<8x1xf32>
    %121 = arith.select %116, %33, %120 : vector<8x1xi1>, vector<8x1xf32>
    %122 = arith.addf %107, %121 : vector<8x1xf32>
    %cst_26 = arith.constant 0.000000e+00 : f32
    %123 = vector.shape_cast %15 : vector<1x128xi1> to vector<1x128xi1>
    %124 = vector.broadcast %123 : vector<1x128xi1> to vector<8x128xi1>
    %125 = vector.broadcast %cst_26 : f32 to vector<8x128xf32>
    %126 = arith.select %124, %105, %125 : vector<8x128xi1>, vector<8x128xf32>
    %cst_27 = arith.constant dense<0.000000e+00> : vector<8xf32>
    %127 = vector.multi_reduction <add>, %126, %cst_27 [1] : vector<8x128xf32> to vector<8xf32>
    %128 = vector.shape_cast %127 : vector<8xf32> to vector<8x1xf32>
    %129 = vector.extract_strided_slice %4 {offsets = [0, 1], sizes = [8, 1], strides = [1, 1]} : vector<8x4xi32> to vector<8x1xi32>
    %c-100_i32_28 = arith.constant -100 : i32
    %130 = vector.broadcast %c-100_i32_28 : i32 to vector<8x1xi32>
    %131 = arith.cmpi ne, %129, %130 : vector<8x1xi32>
    %cst_29 = arith.constant 1.000000e+00 : f32
    %132 = vector.broadcast %cst_29 : f32 to vector<8x1xf32>
    %133 = arith.select %131, %128, %132 : vector<8x1xi1>, vector<8x1xf32>
    %134 = arith.mulf %119, %133 : vector<8x1xf32>
    %cst_30 = arith.constant 0.000000e+00 : f32
    %135 = vector.broadcast %cst_30 : f32 to vector<8x1xf32>
    %136 = arith.select %131, %52, %135 : vector<8x1xi1>, vector<8x1xf32>
    %137 = arith.addf %122, %136 : vector<8x1xf32>
    %cst_31 = arith.constant 0.000000e+00 : f32
    %138 = vector.shape_cast %20 : vector<1x128xi1> to vector<1x128xi1>
    %139 = vector.broadcast %138 : vector<1x128xi1> to vector<8x128xi1>
    %140 = vector.broadcast %cst_31 : f32 to vector<8x128xf32>
    %141 = arith.select %139, %105, %140 : vector<8x128xi1>, vector<8x128xf32>
    %cst_32 = arith.constant dense<0.000000e+00> : vector<8xf32>
    %142 = vector.multi_reduction <add>, %141, %cst_32 [1] : vector<8x128xf32> to vector<8xf32>
    %143 = vector.shape_cast %142 : vector<8xf32> to vector<8x1xf32>
    %144 = vector.extract_strided_slice %4 {offsets = [0, 2], sizes = [8, 1], strides = [1, 1]} : vector<8x4xi32> to vector<8x1xi32>
    %c-100_i32_33 = arith.constant -100 : i32
    %145 = vector.broadcast %c-100_i32_33 : i32 to vector<8x1xi32>
    %146 = arith.cmpi ne, %144, %145 : vector<8x1xi32>
    %cst_34 = arith.constant 1.000000e+00 : f32
    %147 = vector.broadcast %cst_34 : f32 to vector<8x1xf32>
    %148 = arith.select %146, %143, %147 : vector<8x1xi1>, vector<8x1xf32>
    %149 = arith.mulf %134, %148 : vector<8x1xf32>
    %cst_35 = arith.constant 0.000000e+00 : f32
    %150 = vector.broadcast %cst_35 : f32 to vector<8x1xf32>
    %151 = arith.select %146, %71, %150 : vector<8x1xi1>, vector<8x1xf32>
    %152 = arith.addf %137, %151 : vector<8x1xf32>
    %cst_36 = arith.constant 0.000000e+00 : f32
    %153 = vector.shape_cast %25 : vector<1x128xi1> to vector<1x128xi1>
    %154 = vector.broadcast %153 : vector<1x128xi1> to vector<8x128xi1>
    %155 = vector.broadcast %cst_36 : f32 to vector<8x128xf32>
    %156 = arith.select %154, %105, %155 : vector<8x128xi1>, vector<8x128xf32>
    %cst_37 = arith.constant dense<0.000000e+00> : vector<8xf32>
    %157 = vector.multi_reduction <add>, %156, %cst_37 [1] : vector<8x128xf32> to vector<8xf32>
    %158 = vector.shape_cast %157 : vector<8xf32> to vector<8x1xf32>
    %159 = vector.extract_strided_slice %4 {offsets = [0, 3], sizes = [8, 1], strides = [1, 1]} : vector<8x4xi32> to vector<8x1xi32>
    %c-100_i32_38 = arith.constant -100 : i32
    %160 = vector.broadcast %c-100_i32_38 : i32 to vector<8x1xi32>
    %161 = arith.cmpi ne, %159, %160 : vector<8x1xi32>
    %cst_39 = arith.constant 1.000000e+00 : f32
    %162 = vector.broadcast %cst_39 : f32 to vector<8x1xf32>
    %163 = arith.select %161, %158, %162 : vector<8x1xi1>, vector<8x1xf32>
    %164 = arith.mulf %149, %163 : vector<8x1xf32>
    %cst_40 = arith.constant 0.000000e+00 : f32
    %165 = vector.broadcast %cst_40 : f32 to vector<8x1xf32>
    %166 = arith.select %161, %90, %165 : vector<8x1xi1>, vector<8x1xf32>
    %167 = arith.addf %152, %166 : vector<8x1xf32>
    %168 = math.log %164 : vector<8x1xf32>
    %169 = arith.addf %168, %167 : vector<8x1xf32>
    %170 = vector.broadcast %5 : vector<1x128xi32> to vector<8x128xi32>
    %171 = arith.cmpi eq, %170, %103 : vector<8x128xi32>
    %cst_41 = arith.constant 0.000000e+00 : f32
    %172 = vector.broadcast %cst_41 : f32 to vector<8x128xf32>
    %173 = arith.select %171, %3, %172 : vector<8x128xi1>, vector<8x128xf32>
    %cst_42 = arith.constant dense<0.000000e+00> : vector<8xf32>
    %174 = vector.multi_reduction <add>, %173, %cst_42 [1] : vector<8x128xf32> to vector<8xf32>
    %175 = vector.shape_cast %174 : vector<8xf32> to vector<8x1xf32>
    %c0_43 = arith.constant 0 : index
    %c0_44 = arith.constant 0 : index
    %176 = vector.load %arg4[%c0_43, %c0_44] : memref<8x1xf32, #tpu.memory_space<vmem>>, vector<8x1xf32>
    %177 = arith.subf %169, %175 : vector<8x1xf32>
    %178 = arith.addf %176, %177 : vector<8x1xf32>
    %c0_45 = arith.constant 0 : index
    %c0_46 = arith.constant 0 : index
    %179 = vector.load %arg4[%c0_45, %c0_46] : memref<8x1xf32, #tpu.memory_space<vmem>>, vector<8x1xf32>
    tpu.vector_store %arg4[%c0_45, %c0_46], %178 {strides = array<i32>} : memref<8x1xf32, #tpu.memory_space<vmem>>, vector<8x1xf32>,
    %c0_i32_47 = arith.constant 0 : i32
    %180 = arith.cmpi eq, %arg0, %c0_i32_47 : i32
    %181 = arith.extui %180 : i1 to i32
    %c0_i32_48 = arith.constant 0 : i32
    %182 = arith.cmpi ne, %181, %c0_i32_48 : i32
    scf.if %182 {
      %c0_49 = arith.constant 0 : index
      %c0_50 = arith.constant 0 : index
      %183 = vector.load %arg4[%c0_49, %c0_50] : memref<8x1xf32, #tpu.memory_space<vmem>>, vector<8x1xf32>
      %184 = vector.shape_cast %183 : vector<8x1xf32> to vector<1x8x1xf32>
      %cst_51 = arith.constant dense<0.000000e+00> : vector<1xf32>
      %185 = vector.multi_reduction <add>, %184, %cst_51 [1, 2] : vector<1x8x1xf32> to vector<1xf32>
      %186 = vector.shape_cast %185 : vector<1xf32> to vector<1x1x1xf32>
      %187 = vector.extract %186[0, 0, 0] : f32 from vector<1x1x1xf32>
      %188 = vector.broadcast %187 : f32 to vector<1x1xf32>
      %189 = vector.shape_cast %188 : vector<1x1xf32> to vector<1x1xf32>
      %190 = vector.broadcast %189 : vector<1x1xf32> to vector<1x128xf32>
      %c0_52 = arith.constant 0 : index
      %c0_53 = arith.constant 0 : index
      %191 = vector.load %arg3[%c0_52, %c0_53] : memref<1x128xf32, #tpu.memory_space<vmem>>, vector<1x128xf32>
      tpu.vector_store %arg3[%c0_52, %c0_53], %190 {strides = array<i32>} : memref<1x128xf32, #tpu.memory_space<vmem>>, vector<1x128xf32>,
    } else {
    }
    return
  }
  func.func @transform_0(%arg0: i32) -> (i32, i32) {
    %c0_i32 = arith.constant 0 : i32
    %c0_i32_0 = arith.constant 0 : i32
    return %arg0, %c0_i32 : i32, i32
  }
  func.func @transform_1(%arg0: i32) -> (i32, i32) {
    %c0_i32 = arith.constant 0 : i32
    %c0_i32_0 = arith.constant 0 : i32
    return %arg0, %c0_i32 : i32, i32
  }
  func.func @transform_2(%arg0: i32) -> (i32, i32) {
    %c0_i32 = arith.constant 0 : i32
    %c0_i32_0 = arith.constant 0 : i32
    %c0_i32_1 = arith.constant 0 : i32
    return %c0_i32, %c0_i32_0 : i32, i32
  }
}

</mosaic_0001>

<llo_original>
// kernel: bert_ner_loss.1
$region0: #{bert_ner_loss.1}
  #allocation0 [shape = 'u32[]', space=smem, size = 0x4, offset = 0x4, fixed_abs, tag = 'smem constant byte address 0x4 - core index']
  #allocation1 [shape = 'u32[72,128]{1,0:T(1,128)}', space=vmem, size = 0x9000, scoped, tag = 'internal scratch']
  #allocation2 [shape = 'f32[8,1]{1,0:T(8,128)}', space=vmem, size = 0x1000, scoped, tag = 'scratch operand']
  %s0 = inlined_call_operand.vmem [shape: f32[8,128], index: 0, kind: input, shape index: {}]
  %s1 = inlined_call_operand.vmem [shape: s32[8,4], index: 1, kind: input, shape index: {}]
  %s2 = inlined_call_operand.vmem [shape: f32[1,128], index: 2, kind: output, shape index: {}]
  %s3 = sld [smem:[#allocation0]]
  $region26: #{bert_ner_loss.1} parent=0
    _
  %s5 = ssub.s32 1, %s3
  %s6 = scalar_select 0, %s5, %s3
  // Predicated region
  $region2: #{bert_ner_loss.1} parent=0 // pred_check
    _
  $region3: #{bert_ner_loss.1} parent=0 // pred_check_branch
    %8 = sbr.rel (0) target = $region5
  $region4: #{bert_ner_loss.1} parent=0 // pred_region
    _
  $region5: #{bert_ner_loss.1} parent=0 // pred_fallthru
    _
  // Predicated region
  $region6: #{bert_ner_loss.1} parent=0 // pred_check
    _
  $region7: #{bert_ner_loss.1} parent=0 // pred_check_branch
    %10 = sbr.rel (0) target = $region9
  $region8: #{bert_ner_loss.1} parent=0 // pred_region
    _
  $region9: #{bert_ner_loss.1} parent=0 // pred_fallthru
    _
  %p11 = scmp.eq.s32.totalorder 0, 0
  // Predicated region
  $region10: #{bert_ner_loss.1} parent=0 // pred_check
    %p12 = pneg %p11
  $region11: #{bert_ner_loss.1} parent=0 // pred_check_branch
    %14 = sbr.rel (%p12) target = $region13
  $region12: #{bert_ner_loss.1} parent=0 // pred_region
    %vm15 = vcmask 7168
    %16 = vst.msk [vmem:[#allocation2] sm:$0xff] %vm15, 0.0
  $region13: #{bert_ner_loss.1} parent=0 // pred_fallthru
    _
  %v17 = vld [vmem:[%s0] sm:$0xff]
  %v18 = vld [vmem:[%s1] sm:$0xff]
  %v19 = vlaneseq
  %v20 = vand.u32 %v19, 127
  %vm21 = vcmp.ge.s32.totalorder %v20, 0
  %vm22 = vcmp.lt.s32.totalorder %v20, 32
  %vm23 = vmand %vm21, %vm22
  %vm24 = vcmp.ge.s32.totalorder %v20, 32
  %vm25 = vcmp.lt.s32.totalorder %v20, 64
  %vm26 = vmand %vm24, %vm25
  %vm27 = vcmp.ge.s32.totalorder %v20, 64
  %vm28 = vcmp.lt.s32.totalorder %v20, 96
  %vm29 = vmand %vm27, %vm28
  %vm30 = vcmp.ge.s32.totalorder %v20, 96
  %vm31 = vcmp.lt.s32.totalorder %v20, 128
  %vm32 = vmand %vm30, %vm31
  %v33 = vsel %vm23, 1, 0
  %vm34 = vcmp.eq.s32.totalorder %v33, 1
  %v35 = vsel %vm34, %v17, -1e+30
  %36 = vmax.xlane.f32.xlu0 %v35
  %v37 = vpop.xlane.xlu0 %36
  %v38 = vsel %vm34, %v37, 0.0
  %39 = vset.pattern.permute.xlu0 0
  %40 = vperm.xlu0 %39, %v18
  %v41 = vpop.permute.xlu0 %40
  %v42 = vsel %vm34, %v41, 4294967295
  %v43 = vsel %vm26, 1, 0
  %vm44 = vcmp.eq.s32.totalorder %v43, 1
  %v45 = vsel %vm44, %v17, -1e+30
  %46 = vmax.xlane.f32.xlu0 %v45
  %v47 = vpop.xlane.xlu0 %46
  %v48 = vsel %vm44, %v47, %v38
  %v49 = vadd.s32 %v18, 32
  %50 = vset.pattern.permute.xlu0 1
  %51 = vperm.xlu0 %50, %v49
  %v52 = vpop.permute.xlu0 %51
  %v53 = vsel %vm44, %v52, %v42
  %v54 = vsel %vm29, 1, 0
  %vm55 = vcmp.eq.s32.totalorder %v54, 1
  %v56 = vsel %vm55, %v17, -1e+30
  %57 = vmax.xlane.f32.xlu0 %v56
  %v58 = vpop.xlane.xlu0 %57
  %v59 = vsel %vm55, %v58, %v48
  %v60 = vadd.s32 %v18, 64
  %61 = vset.pattern.permute.xlu0 2
  %62 = vperm.xlu0 %61, %v60
  %v63 = vpop.permute.xlu0 %62
  %v64 = vsel %vm55, %v63, %v53
  %v65 = vsel %vm32, 1, 0
  %vm66 = vcmp.eq.s32.totalorder %v65, 1
  %v67 = vsel %vm66, %v17, -1e+30
  %68 = vmax.xlane.f32.xlu0 %v67
  %v69 = vpop.xlane.xlu0 %68
  %v70 = vsel %vm66, %v69, %v59
  %v71 = vadd.s32 %v18, 96
  %72 = vset.pattern.permute.xlu0 3
  %73 = vperm.xlu0 %72, %v71
  %v74 = vpop.permute.xlu0 %73
  %v75 = vsel %vm66, %v74, %v64
  %v76 = vsub.f32 %v17, %v70
  %v77 = vmul.f32 %v76, 1.442695
  %v78 = vpow.pop %v77
  %v79 = vsel %vm34, %v78, 0.0
  %80 = vadd.xlane.f32.xlu0 %v79
  %v81 = vpop.xlane.xlu0 %80
  %vm82 = vcmp.ne.s32.totalorder %v18, 4294967196
  %v83 = vsel %vm82, %v81, 1.0
  %v84 = vsel %vm82, %v37, 0.0
  %v85 = vadd.f32 %v84, 0.0
  %v86 = vsel %vm44, %v78, 0.0
  %87 = vadd.xlane.f32.xlu0 %v86
  %v88 = vpop.xlane.xlu0 %87
  %v89 = vsel %vm82, %v88, 1.0
  %91 = vrot.lane.b32.xlu0 %v89, 127
  %v92 = vpop.permute.xlu0 %91
  %v94 = vmul.f32 %v83, %v92
  %v95 = vsel %vm82, %v47, 0.0
  %97 = vrot.lane.b32.xlu0 %v95, 127
  %v98 = vpop.permute.xlu0 %97
  %v100 = vadd.f32 %v85, %v98
  %v101 = vsel %vm55, %v78, 0.0
  %102 = vadd.xlane.f32.xlu0 %v101
  %v103 = vpop.xlane.xlu0 %102
  %v104 = vsel %vm82, %v103, 1.0
  %106 = vrot.lane.b32.xlu0 %v104, 126
  %v107 = vpop.permute.xlu0 %106
  %v109 = vmul.f32 %v94, %v107
  %v110 = vsel %vm82, %v58, 0.0
  %112 = vrot.lane.b32.xlu0 %v110, 126
  %v113 = vpop.permute.xlu0 %112
  %v115 = vadd.f32 %v100, %v113
  %v116 = vsel %vm66, %v78, 0.0
  %117 = vadd.xlane.f32.xlu0 %v116
  %v118 = vpop.xlane.xlu0 %117
  %v119 = vsel %vm82, %v118, 1.0
  %121 = vrot.lane.b32.xlu0 %v119, 125
  %v122 = vpop.permute.xlu0 %121
  %v124 = vmul.f32 %v109, %v122
  %v125 = vsel %vm82, %v69, 0.0
  %127 = vrot.lane.b32.xlu0 %v125, 125
  %v128 = vpop.permute.xlu0 %127
  %v130 = vadd.f32 %v115, %v128
  %v131 = vlog2.pop %v124
  %v132 = vmul.f32 %v131, 0.6931472
  %v133 = vadd.f32 %v132, %v130
  %vm134 = vcmp.eq.s32.totalorder %v20, %v75
  %v135 = vsel %vm134, %v17, 0.0
  %136 = vadd.xlane.f32.xlu0 %v135
  %v137 = vpop.xlane.xlu0 %136
  %v138 = vld [vmem:[#allocation2] sm:$0xff]
  %v139 = vsub.f32 %v133, %v137
  %v140 = vadd.f32 %v138, %v139
  %vm141 = vcmask 7168
  %142 = vst.msk [vmem:[#allocation2] sm:$0xff] %vm141, %v140
  // Predicated region
  $region14: #{bert_ner_loss.1} parent=0 // pred_check
    %p143 = pneg %p11
  $region15: #{bert_ner_loss.1} parent=0 // pred_check_branch
    %145 = sbr.rel (%p143) target = $region17
  $region16: #{bert_ner_loss.1} parent=0 // pred_region
    %v146 = vld [vmem:[#allocation2] sm:$0xff]
    %v147 = vsel %vm141, %v146, 0.0
    %148 = vadd.xlane.f32.xlu0 %v147
    %v149 = vpop.xlane.xlu0 %148
    %v150 = vrot.slane %v149, 4
    %v151 = vadd.f32 %v149, %v150
    %v152 = vrot.slane %v151, 2
    %v153 = vadd.f32 %v151, %v152
    %v154 = vrot.slane %v153, 1
    %v155 = vadd.f32 %v153, %v154
    %s156 = vtos %v155
    %v157 = vstv %s156
    %158 = vst [vmem:[%s2] sm:$0x1] %v157
  $region17: #{bert_ner_loss.1} parent=0 // pred_fallthru
    _
  // Predicated region
  $region18: #{bert_ner_loss.1} parent=0 // pred_check
    _
  $region19: #{bert_ner_loss.1} parent=0 // pred_check_branch
    %160 = sbr.rel (0) target = $region21
  $region20: #{bert_ner_loss.1} parent=0 // pred_region
    _
  $region21: #{bert_ner_loss.1} parent=0 // pred_fallthru
    _
  // Predicated region
  $region22: #{bert_ner_loss.1} parent=0 // pred_check
    _
  $region23: #{bert_ner_loss.1} parent=0 // pred_check_branch
    %162 = sbr.rel (0) target = $region25
  $region24: #{bert_ner_loss.1} parent=0 // pred_region
    _
  $region25: #{bert_ner_loss.1} parent=0 // pred_fallthru
    _

</llo_original>
